<compile_context>
chip_gen: v7x
topology: tpu7x:2x2x1
jax: 0.10.0
libtpu: 0.0.40
codegen_flags: <defaults>
</compile_context>

<pallas_src>
import jax
import jax.numpy as jnp
from jax.experimental import pallas as pl
from jax.experimental.pallas import tpu as pltpu


def _round_up(x, m):
    return (x + m - 1) // m * m


def _cls_seg_kernel(w_ref, x_ref, b_ref, o_ref):
    # w_ref: (K, C) bf16   x_ref: (C, THW) bf16   b_ref: (K, 1) f32   o_ref: (K, THW) f32
    acc = jnp.dot(w_ref[...], x_ref[...], preferred_element_type=jnp.float32)
    o_ref[...] = (acc + b_ref[...]).astype(o_ref.dtype)


def cls_seg_pallas(x_nchw, weight_kc, bias_k, *,
                   compute_dtype=jnp.bfloat16,
                   out_dtype=jnp.float32,
                   vmem_budget_bytes=10 * 1024 * 1024):
    """1x1 conv (bias fused) in NCHW layout.

    x_nchw:    (N, C, H, W)
    weight_kc: (K, C)   (PyTorch conv weight[K, C, 1, 1] squeezed)
    bias_k:    (K,)
    returns:   (N, K, H, W) in out_dtype
    """
    N, C, H, W = x_nchw.shape
    K = weight_kc.shape[0]
    HW = H * W

    in_bytes = jnp.dtype(compute_dtype).itemsize
    out_bytes = jnp.dtype(out_dtype).itemsize

    # Per-grid-step VMEM = double-buffered X block + double-buffered out block
    # (the (K, C) weight and (K, 1) bias blocks are constant & tiny).
    per_lane_bytes = 2 * (C * in_bytes + K * out_bytes)
    max_tile = max(128, (vmem_budget_bytes // per_lane_bytes) // 128 * 128)
    tile_hw = int(min(max_tile, 8192, _round_up(HW, 128)))
    hw_pad = _round_up(HW, tile_hw)

    x = x_nchw.reshape(N, C, HW).astype(compute_dtype)
    if hw_pad != HW:
        x = jnp.pad(x, ((0, 0), (0, 0), (0, hw_pad - HW)))
    w = weight_kc.astype(compute_dtype)                 # (K, C)
    b = bias_k.astype(jnp.float32).reshape(K, 1)        # (K, 1), broadcast over lanes

    grid = (N, hw_pad // tile_hw)

    cost = pl.CostEstimate(
        flops=2 * N * hw_pad * C * K,
        transcendentals=0,
        bytes_accessed=(N * hw_pad * C * in_bytes      # X stream
                        + K * C * in_bytes             # weight
                        + K * 4                        # bias
                        + N * hw_pad * K * out_bytes), # logits writeback
    )

    out = pl.pallas_call(
        _cls_seg_kernel,
        out_shape=jax.ShapeDtypeStruct((N, K, hw_pad), out_dtype),
        grid_spec=pltpu.PrefetchScalarGridSpec(
            num_scalar_prefetch=0,
            grid=grid,
            in_specs=[
                pl.BlockSpec((K, C), lambda n, t: (0, 0)),             # weight (resident)
                pl.BlockSpec((None, C, tile_hw), lambda n, t: (n, 0, t)),  # X tile
                pl.BlockSpec((K, 1), lambda n, t: (0, 0)),             # bias (resident)
            ],
            out_specs=pl.BlockSpec((None, K, tile_hw), lambda n, t: (n, 0, t)),
        ),
        compiler_params=pltpu.CompilerParams(
            dimension_semantics=("parallel", "parallel"),
        ),
        cost_estimate=cost,
    )(w, x, b)

    out = out[:, :, :HW].reshape(N, K, H, W)
    return out


class BaseDecodeHeadPallas:
    """JAX/Pallas re-implementation of BaseDecodeHead's forward hot path (inference)."""

    def __init__(self, in_channels, channels, *, num_classes,
                 dropout_ratio=0.1, in_index=-1, input_transform=None,
                 align_corners=False, key=None):
        assert input_transform is None, "only input_transform=None supported here"
        assert isinstance(in_channels, int) and isinstance(in_index, int)
        self.in_channels = in_channels
        self.channels = channels
        self.num_classes = num_classes
        self.dropout_ratio = dropout_ratio
        self.in_index = in_index
        self.input_transform = input_transform
        self.align_corners = align_corners

        if key is None:
            key = jax.random.PRNGKey(0)
        # conv_seg: nn.Conv2d(channels, num_classes, kernel_size=1)
        # init_weights(): normal_init(mean=0, std=0.01), bias=0
        w = 0.01 * jax.random.normal(key, (num_classes, channels, 1, 1), jnp.float32)
        self.conv_seg_weight = w                              # (K, C, 1, 1), PyTorch layout
        self.conv_seg_bias = jnp.zeros((num_classes,), jnp.float32)
        # TODO(synk): training-time Dropout2d (channel-wise Bernoulli mask) not implemented;
        #             it is an identity at inference, which is what this forward covers.
        # TODO(synk): 'resize_concat'/'multiple_select' input transforms (bilinear resize +
        #             concat) not implemented; input_transform=None only.

    def _transform_inputs(self, inputs):
        # input_transform is None -> select single feature map.
        return inputs[self.in_index]

    def cls_seg(self, feat_nchw):
        """feat_nchw: (N, C, H, W) -> logits (N, num_classes, H, W)."""
        N, C, H, W = feat_nchw.shape
        assert C == self.channels
        w_kc = self.conv_seg_weight.reshape(self.num_classes, C)   # (K, C)
        return cls_seg_pallas(feat_nchw, w_kc, self.conv_seg_bias)

    def forward(self, inputs):
        feat = self._transform_inputs(inputs)
        return self.cls_seg(feat)


if __name__ == "__main__":
    key = jax.random.PRNGKey(0)
    k_feat, k_param = jax.random.split(key)

    N, C, H, W = 2, 32, 16, 16
    num_classes = 8

    # "List of multi-level img features" -- single selected level (in_index=-1).
    feat = jax.random.normal(k_feat, (N, C, H, W), jnp.float32)
    inputs = [feat]

    head = BaseDecodeHeadPallas(in_channels=C, channels=C,
                                num_classes=num_classes, key=k_param)

    out = head.forward(inputs)
    out = jax.block_until_ready(out)
    assert out.shape == (N, num_classes, H, W)

    # Reference check against plain-JAX 1x1 conv (matmul) for sanity.
    # The kernel streams inputs in bf16 (f32 accumulate), so use a bf16-level tolerance.
    w = head.conv_seg_weight.reshape(num_classes, C)
    ref = jnp.einsum("nchw,kc->nkhw", feat, w) + head.conv_seg_bias[None, :, None, None]
    assert jnp.allclose(out, ref, atol=1e-2, rtol=1e-2), \
        f"max abs err {jnp.max(jnp.abs(out - ref))}"

    print("KERNEL_OK")
</pallas_src>

<mosaic_0001>
module attributes {stable_mosaic.version = 11 : i64} {
  func.func @_cls_seg_kernel(%arg0: i32, %arg1: i32, %arg2: memref<8x32xbf16, #tpu.memory_space<vmem>>, %arg3: memref<1x32x256xbf16, #tpu.memory_space<vmem>>, %arg4: memref<8x1xf32, #tpu.memory_space<vmem>>, %arg5: memref<1x8x256xf32, #tpu.memory_space<vmem>>) attributes {dimension_semantics = [#tpu.dimension_semantics<parallel>, #tpu.dimension_semantics<parallel>], iteration_bounds = array<i64: 2, 1>, scalar_prefetch = 0 : i64, scratch_operands = 0 : i64, tpu.core_type = #tpu.core_type<tc>, window_params = [{pipeline_mode = #tpu.pipeline_mode<synchronous>, transform_indices = @transform_0, window_bounds = array<i64: 8, 32>}, {transform_indices = @transform_1, window_bounds = array<i64: 1, 32, 256>}, {pipeline_mode = #tpu.pipeline_mode<synchronous>, transform_indices = @transform_2, window_bounds = array<i64: 8, 1>}, {transform_indices = @transform_3, window_bounds = array<i64: 1, 8, 256>}]} {
    %c0 = arith.constant 0 : index
    %c0_0 = arith.constant 0 : index
    %0 = vector.load %arg2[%c0, %c0_0] : memref<8x32xbf16, #tpu.memory_space<vmem>>, vector<8x32xbf16>
    %c0_1 = arith.constant 0 : index
    %c0_2 = arith.constant 0 : index
    %c0_3 = arith.constant 0 : index
    %1 = vector.load %arg3[%c0_1, %c0_2, %c0_3] : memref<1x32x256xbf16, #tpu.memory_space<vmem>>, vector<1x32x256xbf16>
    %2 = vector.shape_cast %1 : vector<1x32x256xbf16> to vector<32x256xbf16>
    %cst = arith.constant dense<0.000000e+00> : vector<8x256xf32>
    %3 = tpu.matmul %0, %2, %cst {dimension_numbers = #tpu.dot_dimension_numbers<[1], [0], [0], [1], [0, 0, 1, 1], [], []>} : vector<8x32xbf16>, vector<32x256xbf16>, vector<8x256xf32> -> vector<8x256xf32>
    %c0_4 = arith.constant 0 : index
    %c0_5 = arith.constant 0 : index
    %4 = vector.load %arg4[%c0_4, %c0_5] : memref<8x1xf32, #tpu.memory_space<vmem>>, vector<8x1xf32>
    %5 = vector.broadcast %4 : vector<8x1xf32> to vector<8x256xf32>
    %6 = arith.addf %3, %5 : vector<8x256xf32>
    %c0_6 = arith.constant 0 : index
    %c0_7 = arith.constant 0 : index
    %c0_8 = arith.constant 0 : index
    %7 = vector.load %arg5[%c0_6, %c0_7, %c0_8] : memref<1x8x256xf32, #tpu.memory_space<vmem>>, vector<1x8x256xf32>
    %8 = vector.shape_cast %7 : vector<1x8x256xf32> to vector<8x256xf32>
    %9 = vector.shape_cast %6 : vector<8x256xf32> to vector<1x8x256xf32>
    tpu.vector_store %arg5[%c0_6, %c0_7, %c0_8], %9 {strides = array<i32>} : memref<1x8x256xf32, #tpu.memory_space<vmem>>, vector<1x8x256xf32>,
    return
  }
  func.func @transform_0(%arg0: i32, %arg1: i32) -> (i32, i32) {
    %c0_i32 = arith.constant 0 : i32
    %c0_i32_0 = arith.constant 0 : i32
    %c0_i32_1 = arith.constant 0 : i32
    return %c0_i32, %c0_i32_0 : i32, i32
  }
  func.func @transform_1(%arg0: i32, %arg1: i32) -> (i32, i32, i32) {
    %c0_i32 = arith.constant 0 : i32
    %c0_i32_0 = arith.constant 0 : i32
    return %arg0, %c0_i32, %arg1 : i32, i32, i32
  }
  func.func @transform_2(%arg0: i32, %arg1: i32) -> (i32, i32) {
    %c0_i32 = arith.constant 0 : i32
    %c0_i32_0 = arith.constant 0 : i32
    %c0_i32_1 = arith.constant 0 : i32
    return %c0_i32, %c0_i32_0 : i32, i32
  }
  func.func @transform_3(%arg0: i32, %arg1: i32) -> (i32, i32, i32) {
    %c0_i32 = arith.constant 0 : i32
    %c0_i32_0 = arith.constant 0 : i32
    return %arg0, %c0_i32, %arg1 : i32, i32, i32
  }
}

</mosaic_0001>

<llo_original>
// kernel: tpu_custom_call.1
$region0: #{tpu_custom_call.1}
  #allocation0 [shape = 'u32[]', space=smem, size = 0x4, offset = 0x4, fixed_abs, tag = 'smem constant byte address 0x4 - core index']
  #allocation1 [shape = 'u32[144,128]{1,0:T(1,128)}', space=vmem, size = 0x12000, scoped, tag = 'internal scratch']
  %s0 = inlined_call_operand.vmem [shape: bf16[8,32], index: 0, kind: input, shape index: {}]
  %s1 = inlined_call_operand.hbm [shape: bf16[2,32,256], index: 1, kind: input, shape index: {}]
  %s2 = inlined_call_operand.vmem [shape: f32[8,1], index: 2, kind: input, shape index: {}]
  %s3 = inlined_call_operand.hbm [shape: f32[2,8,256], index: 3, kind: output, shape index: {}]
  %s4 = sld [smem:[#allocation0]]
  $region49: #{tpu_custom_call.1} parent=0
    _
  %s6 = ssub.s32 1, %s4
  %s7 = scalar_select 0, %s6, %s4
  $region1: #{tpu_custom_call.1} parent=0
    #allocation2 [shape = 'u8[32768]{0}', space=vmem, size = 0x8000, scoped, tag = 'input window, operand 1']
    #allocation3 [shape = 's32[2]{0}', space=sflag, size = 0x8, scoped, tag = 'scoped memory for tpu_custom_call.1']
    #allocation4 [shape = 's32[2]{0}', space=sflag, size = 0x8, scoped, tag = 'scoped memory for tpu_custom_call.1']
    #allocation5 [shape = 'u8[16384]{0}', space=vmem, size = 0x4000, scoped, tag = 'output window, operand 0']
    %8 = vsyncpa [#allocation3], 0
    %s9 = scalar_lea.sflag [#allocation3], 1
    %10 = vsyncpa %s9, 0
    %11 = vsyncpa [#allocation4], 0
    %s12 = scalar_lea.sflag [#allocation4], 1
    %13 = vsyncpa %s12, 0
    loop: start=0, step=1, limit=4
    $region2: #{tpu_custom_call.1} parent=1 // loop_pre_header
      _
    $region3: #{tpu_custom_call.1} parent=1 // loop_header
      %s15 = sphi 0, %s19
      %p16 = scmp.ge.s32.totalorder %s15, 4
      %s22 = sphi 0, %s34
      %s23 = sphi 0, %s30
      %s24 = sphi 0, %s22
      %s25 = sphi 0, %s23
      %s26 = sphi 0, %s24
      %s27 = sphi 0, %s25
      %s35 = sphi 0, %s35
      %s37 = sphi 0, %s35
      %s38 = sphi 0, %s37
      %s52 = sphi 0, %s38
      %s60 = sphi 0, %s62
      %s63 = sphi 0, %s60
      %s64 = sphi 0, %s63
      %s80 = sphi 0, %s64
      %s84 = sphi 0, %s84
      %s86 = sphi 0, %s84
      %s87 = sphi 0, %s86
      %s101 = sphi 0, %s87
      %s109 = sphi 0, %s111
      %s112 = sphi 0, %s109
      %s113 = sphi 0, %s112
      %s129 = sphi 0, %s113
    $region4: #{tpu_custom_call.1} parent=1 // loop_header_branch
      %18 = sbr.rel (%p16) target = $region8
    $region5: #{tpu_custom_call.1} parent=1 // loop_body
      %s20 = ssub.s32 %s15, 1
      %s21 = ssub.s32 %s15, 2
      %s28 = sadd.s32 1, %s23
      %p29 = scmp.ge.s32.totalorder %s28, 1
      %s30 = scalar_select %p29, 0, %s28
      %s31 = sadd.s32 1, %s22
      %s32 = scalar_select %p29, %s31, %s22
      %p33 = scmp.ge.s32.totalorder %s32, 2
      %s34 = scalar_select %p33, 0, %s32
      %s36 = sadd.s32 %s35, 1
      %p39 = scmp.eq.s32.totalorder %s15, 1
      %p40 = scmp.ne.s32.totalorder %s35, %s37
      %p41 = scmp.eq.s32.totalorder %s15, 0
      %p42 = por %p40, %p41
      %p43 = scmp.ne.s32.totalorder %s35, %s37
      %p44 = scmp.eq.s32.totalorder %s20, 1
      %p45 = por %p43, %p44
      %p46 = scmp.ne.s32.totalorder %s37, %s38
      %p47 = scmp.eq.s32.totalorder %s20, 0
      %p48 = por %p46, %p47
      %p49 = scmp.ne.s32.totalorder %s37, %s38
      %p50 = scmp.eq.s32.totalorder %s21, 1
      %p51 = por %p49, %p50
      %p53 = scmp.ne.s32.totalorder %s38, %s52
      %p54 = scmp.eq.s32.totalorder %s21, 0
      %p55 = por %p53, %p54
      %s56 = ssub.s32 %s22, %s34
      %s57 = ssub.s32 %s23, %s30
      %s58 = sor.u32 %s56, %s57
      %p59 = scmp.eq.s32.totalorder %s58, 0
      %s61 = sadd.s32 %s60, 1
      %s62 = scalar_select %p59, %s60, %s61
      %p65 = pneg %p59
      %p66 = scmp.eq.s32.totalorder %s15, 1
      %p67 = por %p65, %p66
      %p68 = scmp.ne.s32.totalorder %s60, %s63
      %p69 = scmp.eq.s32.totalorder %s15, 0
      %p70 = por %p68, %p69
      %p71 = scmp.ne.s32.totalorder %s60, %s63
      %p72 = scmp.eq.s32.totalorder %s20, 1
      %p73 = por %p71, %p72
      %p74 = scmp.ne.s32.totalorder %s63, %s64
      %p75 = scmp.eq.s32.totalorder %s20, 0
      %p76 = por %p74, %p75
      %p77 = scmp.ne.s32.totalorder %s63, %s64
      %p78 = scmp.eq.s32.totalorder %s21, 1
      %p79 = por %p77, %p78
      %p81 = scmp.ne.s32.totalorder %s64, %s80
      %p82 = scmp.eq.s32.totalorder %s21, 0
      %p83 = por %p81, %p82
      %s85 = sadd.s32 %s84, 1
      %p88 = scmp.eq.s32.totalorder %s15, 1
      %p89 = scmp.ne.s32.totalorder %s84, %s86
      %p90 = scmp.eq.s32.totalorder %s15, 0
      %p91 = por %p89, %p90
      %p92 = scmp.ne.s32.totalorder %s84, %s86
      %p93 = scmp.eq.s32.totalorder %s20, 1
      %p94 = por %p92, %p93
      %p95 = scmp.ne.s32.totalorder %s86, %s87
      %p96 = scmp.eq.s32.totalorder %s20, 0
      %p97 = por %p95, %p96
      %p98 = scmp.ne.s32.totalorder %s86, %s87
      %p99 = scmp.eq.s32.totalorder %s21, 1
      %p100 = por %p98, %p99
      %p102 = scmp.ne.s32.totalorder %s87, %s101
      %p103 = scmp.eq.s32.totalorder %s21, 0
      %p104 = por %p102, %p103
      %s105 = ssub.s32 %s22, %s34
      %s106 = ssub.s32 %s23, %s30
      %s107 = sor.u32 %s105, %s106
      %p108 = scmp.eq.s32.totalorder %s107, 0
      %s110 = sadd.s32 %s109, 1
      %s111 = scalar_select %p108, %s109, %s110
      %p114 = pneg %p108
      %p115 = scmp.eq.s32.totalorder %s15, 1
      %p116 = por %p114, %p115
      %p117 = scmp.ne.s32.totalorder %s109, %s112
      %p118 = scmp.eq.s32.totalorder %s15, 0
      %p119 = por %p117, %p118
      %p120 = scmp.ne.s32.totalorder %s109, %s112
      %p121 = scmp.eq.s32.totalorder %s20, 1
      %p122 = por %p120, %p121
      %p123 = scmp.ne.s32.totalorder %s112, %s113
      %p124 = scmp.eq.s32.totalorder %s20, 0
      %p125 = por %p123, %p124
      %p126 = scmp.ne.s32.totalorder %s112, %s113
      %p127 = scmp.eq.s32.totalorder %s21, 1
      %p128 = por %p126, %p127
      %p130 = scmp.ne.s32.totalorder %s113, %s129
      %p131 = scmp.eq.s32.totalorder %s21, 0
      %p132 = por %p130, %p131
      %p133 = scmp.le.s32.totalorder 1, %s15
      %p134 = scmp.lt.s32.totalorder %s15, 3
      %p135 = pnand %p133, %p134
      %p136 = pneg %p135
      // Predicated region
      $region9: #{tpu_custom_call.1} parent=5 // pred_check
        _
      $region10: #{tpu_custom_call.1} parent=5 // pred_check_branch
        %138 = sbr.rel (%p135) target = $region12
      $region11: #{tpu_custom_call.1} parent=5 // pred_region
        %s139 = ssub.s32 %s15, 1
        // Predicated region
        $region13: #{tpu_custom_call.1} parent=11 // pred_check
          %p140 = pneg %p48
        $region14: #{tpu_custom_call.1} parent=11 // pred_check_branch
          %142 = sbr.rel (%p140) target = $region16
        $region15: #{tpu_custom_call.1} parent=11 // pred_region
          _
        $region16: #{tpu_custom_call.1} parent=11 // pred_fallthru
          _
        // Predicated region
        $region17: #{tpu_custom_call.1} parent=11 // pred_check
          %p143 = pneg %p97
        $region18: #{tpu_custom_call.1} parent=11 // pred_check_branch
          %145 = sbr.rel (%p143) target = $region20
        $region19: #{tpu_custom_call.1} parent=11 // pred_region
          _
        $region20: #{tpu_custom_call.1} parent=11 // pred_fallthru
          _
      $region12: #{tpu_custom_call.1} parent=5 // pred_fallthru
        _
      %p146 = scmp.lt.s32.totalorder %s15, 2
      // Predicated region
      $region21: #{tpu_custom_call.1} parent=5 // pred_check
        %p147 = pneg %p146
      $region22: #{tpu_custom_call.1} parent=5 // pred_check_branch
        %149 = sbr.rel (%p147) target = $region24
      $region23: #{tpu_custom_call.1} parent=5 // pred_region
        // Predicated region
        $region25: #{tpu_custom_call.1} parent=23 // pred_check
          %p150 = pneg %p70
        $region26: #{tpu_custom_call.1} parent=23 // pred_check_branch
          %152 = sbr.rel (%p150) target = $region28
        $region27: #{tpu_custom_call.1} parent=23 // pred_region
          %s153 = sand.u32 %s60, 1
          %s154 = scalar_lea.sflag [#allocation3], %s153
          %s155 = sand.u32 %s60, 1
          %s156 = smul.addr %s155, 32
          %s157 = scalar_lea.vmem [#allocation2], %s156
          %s158 = smul.u32 2, %s23
          %s160 = ssub.s32 512, 512
          %161 = vsyncadd %s154, %s160
          %s162 = smul.addr %s22, 8
          %s163 = sadd.s32 %s158, %s162
          %s164 = smul.addr %s163, 64
          %s165 = scalar_lea.hbm %s1, %s164
          %s166 = sshll.u32 %s157, 4
          %s167 = int_to_ptr.vmem [resolvable:$true] %s166
          %172 = dma.hbm_to_vmem [thread:$0]  %s165, 512, %s167, %s154, 128, 128, 8
        $region28: #{tpu_custom_call.1} parent=23 // pred_fallthru
          _
      $region24: #{tpu_custom_call.1} parent=5 // pred_fallthru
        _
      %p173 = scmp.le.s32.totalorder 1, %s15
      %p174 = scmp.lt.s32.totalorder %s15, 3
      %p175 = pnand %p173, %p174
      %p176 = pneg %p175
      // Predicated region
      $region29: #{tpu_custom_call.1} parent=5 // pred_check
        _
      $region30: #{tpu_custom_call.1} parent=5 // pred_check_branch
        %178 = sbr.rel (%p175) target = $region32
      $region31: #{tpu_custom_call.1} parent=5 // pred_region
        %s179 = ssub.s32 %s15, 1
        %s180 = sand.u32 %s63, 1
        %s181 = scalar_lea.sflag [#allocation3], %s180
        %s182 = sand.u32 %s63, 1
        %s183 = smul.addr %s182, 32
        %s184 = scalar_lea.vmem [#allocation2], %s183
        // Predicated region
        $region33: #{tpu_custom_call.1} parent=31 // pred_check
          %p185 = pneg %p76
        $region34: #{tpu_custom_call.1} parent=31 // pred_check_branch
          %187 = sbr.rel (%p185) target = $region36
        $region35: #{tpu_custom_call.1} parent=31 // pred_region
          %188 = dma.done %s181, 512
        $region36: #{tpu_custom_call.1} parent=31 // pred_fallthru
          _
        %p189 = pneg %p48
        %p190 = pneg %p45
        %s191 = sand.u32 %s63, 1
        %s192 = scalar_lea.sflag [#allocation3], %s191
        %s193 = sand.u32 %s63, 1
        %s194 = smul.addr %s193, 32
        %s195 = scalar_lea.vmem [#allocation2], %s194
        %p196 = pneg %p76
        %p197 = pneg %p73
        %p198 = pneg %p97
        %p199 = pneg %p94
        %p200 = pneg %p125
        %p201 = pneg %p122
        %s202 = sand.u32 %s112, 1
        %s203 = scalar_lea.sflag [#allocation4], %s202
        %s204 = sand.u32 %s112, 1
        %s205 = smul.addr %s204, 16
        %s206 = scalar_lea.vmem [#allocation5], %s205
        %s207 = smul.u32 2, %s25
        %s208 = smul.u32 2, %s25
        %v210 = vld [vmem:[%s0] sm:$0xf]
        %v211 = vld [vmem:[%s184] sm:$0xff]
        %v212 = vld [vmem:[%s184 + $0x8] sm:$0xff]
        %v213 = vld [vmem:[%s184 + $0x10] sm:$0xff]
        %v214 = vld [vmem:[%s184 + $0x18] sm:$0xff]
        %v215 = vld [vmem:[%s2] sm:$0xff]
        %217 = vset.pattern.permute.xlu0 0
        %218 = vperm.xlu0 %217, %v215
        %v219 = vpop.permute.xlu0 %218
        %v225 = vunpack.c.l.b16 %v211
        %v226 = vunpack.c.h.b16 %v211
        %v227 = vunpack.c.l.b16 %v212
        %v228 = vunpack.c.h.b16 %v212
        %v229 = vunpack.c.l.b16 %v213
        %v230 = vunpack.c.h.b16 %v213
        %v231 = vunpack.c.l.b16 %v214
        %v232 = vunpack.c.h.b16 %v214
        %v233 = vpack.c.b16 %v227, %v225
        %v234 = vpack.c.b16 %v228, %v226
        %v235 = vpack.c.b16 %v231, %v229
        %v236 = vpack.c.b16 %v232, %v230
        %vm241 = vcmask 261120
        %v243 = vsel %vm241, %v210, 0
        %245 = vmatprep.subr.bf16.mxu0 %v234
        %246 = vmatpush1.bf16.msra.mxu0 %v233
        %247 = vmatprep.subr.bf16.mxu0 %v236
        %248 = vmatpush1.bf16.msra.mxu0 %v235
        %249 = vmatprep.subr.bf16.mxu0 0
        %250 = vmatpush1.bf16.msra.mxu0 0
        %251 = vmatprep.subr.bf16.mxu0 0
        %252 = vmatpush1.bf16.msra.mxu0 0
        %253 = vmatprep.subr.bf16.mxu0 0
        %254 = vmatpush1.bf16.msra.mxu0 0
        %255 = vmatprep.subr.bf16.mxu0 0
        %256 = vmatpush1.bf16.msra.mxu0 0
        %257 = vmatprep.subr.bf16.mxu0 0
        %258 = vmatpush1.bf16.msra.mxu0 0
        %259 = vmatprep.subr.bf16.mxu0 0
        %260 = vmatpush1.bf16.msra.mxu0 0
        %261 = vmatprep.subr.bf16.mxu0 0
        %262 = vmatpush1.bf16.msra.mxu0 0
        %263 = vmatprep.subr.bf16.mxu0 0
        %264 = vmatpush1.bf16.msra.mxu0 0
        %265 = vmatprep.subr.bf16.mxu0 0
        %266 = vmatpush1.bf16.msra.mxu0 0
        %267 = vmatprep.subr.bf16.mxu0 0
        %268 = vmatpush1.bf16.msra.mxu0 0
        %269 = vmatprep.subr.bf16.mxu0 0
        %270 = vmatpush1.bf16.msra.mxu0 0
        %271 = vmatprep.subr.bf16.mxu0 0
        %272 = vmatpush1.bf16.msra.mxu0 0
        %273 = vmatprep.subr.bf16.mxu0 0
        %274 = vmatpush1.bf16.msra.mxu0 0
        %275 = vmatprep.subr.bf16.mxu0 0
        %276 = vmatpush1.bf16.msra.mxu0 0
        %277 = vmatprep.mubr.bf16.mxu0 0
        %278 = vmatmul.mubr.bf16.gmra.mrb[0].mxu0 %v243
        %v279 = vpop.f32.mrb[0].mxu0
        %v280 = vadd.f32 %v219, %v279
        %v281 = vpop.f32.mrb[0].mxu0
        %v282 = vadd.f32 %v219, %v281
        %v283 = vpop.f32.mrb[0].mxu0
        %v284 = vpop.f32.mrb[0].mxu0
        %285 = vdwg.mxu0
        %286 = vst [vmem:[%s206] sm:$0xff] %v280
        %287 = vst [vmem:[%s206 + $0x8] sm:$0xff] %v282
        %s288 = sand.u32 %s112, 1
        %s289 = scalar_lea.sflag [#allocation4], %s288
        %s290 = sand.u32 %s112, 1
        %s291 = smul.addr %s290, 16
        %s292 = scalar_lea.vmem [#allocation5], %s291
        // Predicated region
        $region37: #{tpu_custom_call.1} parent=31 // pred_check
          %p293 = pneg %p122
        $region38: #{tpu_custom_call.1} parent=31 // pred_check_branch
          %295 = sbr.rel (%p293) target = $region40
        $region39: #{tpu_custom_call.1} parent=31 // pred_region
          %s296 = smul.u32 2, %s25
          %s298 = ssub.s32 256, 256
          %299 = vsyncadd %s289, %s298
          %s300 = smul.addr %s24, 2
          %s301 = sadd.s32 %s296, %s300
          %s302 = smul.addr %s301, 128
          %s303 = scalar_lea.hbm %s3, %s302
          %s305 = sshll.u32 %s292, 4
          %s306 = int_to_ptr.vmem [resolvable:$true] %s305
          %308 = dma.vmem_to_hbm [thread:$0]  %s306, 256, %s303, %s289
        $region40: #{tpu_custom_call.1} parent=31 // pred_fallthru
          _
      $region32: #{tpu_custom_call.1} parent=5 // pred_fallthru
        _
      %p309 = scmp.le.s32.totalorder 2, %s15
      // Predicated region
      $region41: #{tpu_custom_call.1} parent=5 // pred_check
        %p310 = pneg %p309
      $region42: #{tpu_custom_call.1} parent=5 // pred_check_branch
        %312 = sbr.rel (%p310) target = $region44
      $region43: #{tpu_custom_call.1} parent=5 // pred_region
        %s313 = ssub.s32 %s15, 2
        // Predicated region
        $region45: #{tpu_custom_call.1} parent=43 // pred_check
          %p314 = pneg %p128
        $region46: #{tpu_custom_call.1} parent=43 // pred_check_branch
          %316 = sbr.rel (%p314) target = $region48
        $region47: #{tpu_custom_call.1} parent=43 // pred_region
          %s317 = sand.u32 %s113, 1
          %s318 = scalar_lea.sflag [#allocation4], %s317
          %s319 = sand.u32 %s113, 1
          %s320 = smul.addr %s319, 16
          %s321 = scalar_lea.vmem [#allocation5], %s320
          %322 = dma.done %s318, 256
        $region48: #{tpu_custom_call.1} parent=43 // pred_fallthru
          _
      $region44: #{tpu_custom_call.1} parent=5 // pred_fallthru
        _
    $region6: #{tpu_custom_call.1} parent=1 // loop_footer
      %s19 = sadd.s32 1, %s15
    $region7: #{tpu_custom_call.1} parent=1 // loop_footer_branch
      %14 = sbr.rel target = $region3
    $region8: #{tpu_custom_call.1} parent=1 // loop_exit
      _
    %323 = vsyncpa [#allocation3], 1
    %s324 = scalar_lea.sflag [#allocation3], 1
    %325 = vsyncpa %s324, 1
    %326 = vsyncpa [#allocation4], 1
    %s327 = scalar_lea.sflag [#allocation4], 1
    %328 = vsyncpa %s327, 1

</llo_original>
